<compile_context>
chip_gen: v7x
topology: tpu7x:2x2x1
jax: 0.10.0
libtpu: 0.0.40
codegen_flags: <defaults>
</compile_context>

<pallas_src>
import jax
import jax.numpy as jnp
from jax.experimental import pallas as pl
from jax.experimental.pallas import tpu as pltpu


_TWO_PASS_TILE_BYTES = 3 * 1024 * 1024   # lane-dense S tiles (>=~85% of HBM roofline)
_FUSED_SLACK_BYTES = 2 * 1024 * 1024     # headroom for small in-kernel temporaries


def _vmem_limit_bytes():
    """Generation-aware scoped-VMEM cap: ~3/4 of physical VMEM.
    128-MiB parts (v5e/v6e) -> 96 MiB; 64-MiB parts (v7x) -> 48 MiB."""
    try:
        cap = int(pltpu.get_tpu_info().vmem_capacity_bytes)
    except Exception:
        cap = 64 * 1024 * 1024
    return max(32 * 1024 * 1024, (cap * 3) // 4)


# ---------------------------------------------------------------------------
# Fused single-pass kernel: one batch element's (C, S) slab resident in VMEM.
# ---------------------------------------------------------------------------
def _fused_kernel(x_ref, w1t_ref, w2_ref, o_ref):
    x = x_ref[0]                                                     # (C, S)
    # Global average pool over spatial: lane reduce with f32 accumulation.
    # (1/S is folded into w1t on the host.)
    pooled = jnp.sum(x, axis=-1, keepdims=True, dtype=jnp.float32)   # (C, 1)
    # Tiny FCs on the VPU/XLU (broadcast-multiply + reduce) — keeps the short
    # fused grid off the MXU fill/drain path.  w1t is (C, Cr), w2 is (C, Cr).
    h = jnp.maximum(
        jnp.sum(w1t_ref[...] * pooled, axis=0, keepdims=True), 0.0)  # (1, Cr)
    att = jax.nn.sigmoid(
        jnp.sum(w2_ref[...] * h, axis=-1, keepdims=True))            # (C, 1)
    # Multiply in the input dtype (no f32 promotion of the whole slab).
    o_ref[0] = x * att.astype(x.dtype)


def _channel_attention_fused(x_ncs, w1t, w2, vmem_limit):
    N, C, S = x_ncs.shape
    Cr = w1t.shape[1]
    return pl.pallas_call(
        _fused_kernel,
        out_shape=jax.ShapeDtypeStruct((N, C, S), x_ncs.dtype),
        grid_spec=pltpu.PrefetchScalarGridSpec(
            num_scalar_prefetch=0,
            grid=(N,),
            in_specs=[
                pl.BlockSpec((1, C, S), lambda n: (n, 0, 0)),
                pl.BlockSpec((C, Cr), lambda n: (0, 0)),
                pl.BlockSpec((C, Cr), lambda n: (0, 0)),
            ],
            out_specs=pl.BlockSpec((1, C, S), lambda n: (n, 0, 0)),
        ),
        compiler_params=pltpu.CompilerParams(
            dimension_semantics=("parallel",),
            vmem_limit_bytes=vmem_limit),
    )(x_ncs, w1t, w2)


# ---------------------------------------------------------------------------
# Two-pass path: tiled pool -> (FC fused into) tiled scale.
# ---------------------------------------------------------------------------
def _pool_kernel(x_ref, sum_ref):
    # Output block index constant along the S axis -> resident accumulator.
    @pl.when(pl.program_id(1) == 0)
    def _():
        sum_ref[...] = jnp.zeros_like(sum_ref)
    sum_ref[...] += jnp.sum(x_ref[...], axis=-1, keepdims=True,
                            dtype=jnp.float32)                       # (1, C, 1)


def _scale_kernel(sums_ref, w1t_ref, w2_ref, x_ref, o_ref):
    # Recompute the tiny FC per step (a few hundred flops — free vs the DMA of
    # a multi-MiB tile); avoids a separate XLA dispatch and an att round trip.
    pooled = sums_ref[0]                                             # (C, 1) f32
    h = jnp.maximum(
        jnp.sum(w1t_ref[...] * pooled, axis=0, keepdims=True), 0.0)  # (1, Cr)
    att = jax.nn.sigmoid(
        jnp.sum(w2_ref[...] * h, axis=-1, keepdims=True))            # (C, 1)
    o_ref[0] = x_ref[0] * att.astype(x_ref.dtype)


def _choose_s_tile(s_pad, C, itemsize):
    """Largest multiple-of-128 divisor of s_pad whose (C, tile) slab fits the
    per-tile byte budget.  s_pad is a multiple of 128.  O(sqrt) host scan."""
    cap_lanes = max(128, ((_TWO_PASS_TILE_BYTES // (C * itemsize)) // 128) * 128)
    m = s_pad // 128
    best = 1
    d = 1
    while d * d <= m:
        if m % d == 0:
            for cand in (d, m // d):
                if cand * 128 <= cap_lanes and cand > best:
                    best = cand
        d += 1
    return best * 128


def _channel_attention_two_pass(x_ncs, w1t, w2, s_tile, vmem_limit):
    N, C, S = x_ncs.shape
    Cr = w1t.shape[1]
    n_s = S // s_tile

    # Pass 1: per-channel spatial sums (reduction axis last, "arbitrary").
    sums = pl.pallas_call(
        _pool_kernel,
        out_shape=jax.ShapeDtypeStruct((N, C, 1), jnp.float32),
        grid_spec=pltpu.PrefetchScalarGridSpec(
            num_scalar_prefetch=0,
            grid=(N, n_s),
            in_specs=[pl.BlockSpec((1, C, s_tile), lambda n, s: (n, 0, s))],
            out_specs=pl.BlockSpec((1, C, 1), lambda n, s: (n, 0, 0)),
        ),
        compiler_params=pltpu.CompilerParams(
            dimension_semantics=("parallel", "arbitrary"),
            vmem_limit_bytes=vmem_limit),
    )(x_ncs)

    # Pass 2: lane-dense FC + scale, fully parallel over (N, S_tiles).
    return pl.pallas_call(
        _scale_kernel,
        out_shape=jax.ShapeDtypeStruct((N, C, S), x_ncs.dtype),
        grid_spec=pltpu.PrefetchScalarGridSpec(
            num_scalar_prefetch=0,
            grid=(N, n_s),
            in_specs=[
                pl.BlockSpec((1, C, 1), lambda n, s: (n, 0, 0)),
                pl.BlockSpec((C, Cr), lambda n, s: (0, 0)),
                pl.BlockSpec((C, Cr), lambda n, s: (0, 0)),
                pl.BlockSpec((1, C, s_tile), lambda n, s: (n, 0, s)),
            ],
            out_specs=pl.BlockSpec((1, C, s_tile), lambda n, s: (n, 0, s)),
        ),
        compiler_params=pltpu.CompilerParams(
            dimension_semantics=("parallel", "parallel"),
            vmem_limit_bytes=vmem_limit),
    )(sums, w1t, w2, x_ncs)


# ---------------------------------------------------------------------------
# Public wrapper: PyTorch-compatible shapes (NCDHW in, NCDHW out).
# ---------------------------------------------------------------------------
def channel_attention(x_ncdhw, w1, w2, *, max_fused_slab_bytes=None):
    """x: (N, C, D, H, W).  w1: (C//r, C) fc1 weight.  w2: (C, C//r) fc2 weight."""
    N, C, D, H, W = x_ncdhw.shape
    Cr = w1.shape[0]
    S = D * H * W
    itemsize = jnp.dtype(x_ncdhw.dtype).itemsize

    # Free metadata reshape (no transpose): channels on sublanes, spatial on lanes.
    x_ncs = x_ncdhw.reshape(N, C, S)
    # Fold the mean's 1/S into fc1; pre-transpose so the kernels never transpose.
    w1t = (w1.astype(jnp.float32) * jnp.float32(1.0 / S)).T          # (C, Cr)
    w2f = w2.astype(jnp.float32)                                     # (C, Cr)

    vmem_limit = _vmem_limit_bytes()
    weight_bytes = 2 * C * Cr * 4
    slab_bytes = C * S * itemsize                                    # input dtype

    # Fused-path budget: double-buffered input + output slabs (4x) + slack.
    fused_cap = max(0, (vmem_limit - weight_bytes - _FUSED_SLACK_BYTES) // 4)
    if max_fused_slab_bytes is not None:
        fused_cap = min(fused_cap, max_fused_slab_bytes)
    use_fused = slab_bytes <= fused_cap

    # Small-N / large-S: a grid of only N steps gives no DMA/compute overlap
    # (and leaves a v7x TensorCore idle); the (N, S_tiles) two-pass grid has
    # many steps for both cores, despite re-reading x once.
    if use_fused and N < 4 and slab_bytes >= 4 * _TWO_PASS_TILE_BYTES:
        use_fused = False

    if use_fused:
        out_ncs = _channel_attention_fused(x_ncs, w1t, w2f, vmem_limit)
    else:
        # Pad S up to a multiple of 128 (zeros don't change the pooled sum;
        # the true 1/S is already folded into w1t).
        s_pad = ((S + 127) // 128) * 128
        x_in = x_ncs
        if s_pad != S:
            x_in = jnp.pad(x_ncs, ((0, 0), (0, 0), (0, s_pad - S)))
        s_tile = _choose_s_tile(s_pad, C, itemsize)
        out_ncs = _channel_attention_two_pass(x_in, w1t, w2f, s_tile, vmem_limit)
        if s_pad != S:
            out_ncs = out_ncs[:, :, :S]

    return out_ncs.reshape(N, C, D, H, W)


def channel_attention_ref(x, w1, w2):
    """Pure-JAX reference mirroring the PyTorch forward."""
    pooled = jnp.mean(x, axis=(2, 3, 4))                   # (N, C)
    h = jnp.maximum(pooled @ w1.T, 0.0)                    # (N, Cr)
    att = jax.nn.sigmoid(h @ w2.T)                         # (N, C)
    return x * att[:, :, None, None, None]


if __name__ == "__main__":
    key = jax.random.PRNGKey(0)
    kx, k1, k2, kx2 = jax.random.split(key, 4)

    # Shapes consistent with the module: reduction_ratio=16 -> C=32, Cr=2.
    N, C = 2, 32
    Cr = C // 16
    w1 = jax.random.normal(k1, (Cr, C), dtype=jnp.float32) * 0.1
    w2 = jax.random.normal(k2, (C, Cr), dtype=jnp.float32) * 0.1

    # Case 1: small volume -> fused single-pass path (grid (N,)).
    x = jax.random.normal(kx, (N, C, 4, 4, 4), dtype=jnp.float32)
    out = jax.block_until_ready(channel_attention(x, w1, w2))
    ref = channel_attention_ref(x, w1, w2)
    assert out.shape == x.shape
    assert jnp.allclose(out, ref, atol=1e-5, rtol=1e-5)

    # Case 2: forced through the two-pass path with S = 4*8*9 = 288 (not a
    # multiple of 128) to exercise the padding + tiled pool/scale kernels.
    x2 = jax.random.normal(kx2, (N, C, 4, 8, 9), dtype=jnp.float32)
    out2 = jax.block_until_ready(
        channel_attention(x2, w1, w2, max_fused_slab_bytes=0))
    ref2 = channel_attention_ref(x2, w1, w2)
    assert out2.shape == x2.shape
    assert jnp.allclose(out2, ref2, atol=1e-5, rtol=1e-5)

    print("KERNEL_OK")
</pallas_src>

<mosaic_0001>
module attributes {stable_mosaic.version = 11 : i64} {
  func.func @_fused_kernel(%arg0: i32, %arg1: memref<1x32x64xf32, #tpu.memory_space<vmem>>, %arg2: memref<32x2xf32, #tpu.memory_space<vmem>>, %arg3: memref<32x2xf32, #tpu.memory_space<vmem>>, %arg4: memref<1x32x64xf32, #tpu.memory_space<vmem>>) attributes {dimension_semantics = [#tpu.dimension_semantics<parallel>], iteration_bounds = array<i64: 2>, scalar_prefetch = 0 : i64, scratch_operands = 0 : i64, tpu.core_type = #tpu.core_type<tc>, window_params = [{transform_indices = @transform_0, window_bounds = array<i64: 1, 32, 64>}, {pipeline_mode = #tpu.pipeline_mode<synchronous>, transform_indices = @transform_1, window_bounds = array<i64: 32, 2>}, {pipeline_mode = #tpu.pipeline_mode<synchronous>, transform_indices = @transform_2, window_bounds = array<i64: 32, 2>}, {transform_indices = @transform_3, window_bounds = array<i64: 1, 32, 64>}]} {
    %c0 = arith.constant 0 : index
    %c0_0 = arith.constant 0 : index
    %c0_1 = arith.constant 0 : index
    %0 = vector.load %arg1[%c0, %c0_0, %c0_1] : memref<1x32x64xf32, #tpu.memory_space<vmem>>, vector<1x32x64xf32>
    %1 = vector.shape_cast %0 : vector<1x32x64xf32> to vector<32x64xf32>
    %cst = arith.constant dense<0.000000e+00> : vector<32xf32>
    %2 = vector.multi_reduction <add>, %1, %cst [1] : vector<32x64xf32> to vector<32xf32>
    %3 = vector.shape_cast %2 : vector<32xf32> to vector<32x1xf32>
    %c0_2 = arith.constant 0 : index
    %c0_3 = arith.constant 0 : index
    %4 = vector.load %arg2[%c0_2, %c0_3] : memref<32x2xf32, #tpu.memory_space<vmem>>, vector<32x2xf32>
    %5 = vector.broadcast %3 : vector<32x1xf32> to vector<32x2xf32>
    %6 = arith.mulf %4, %5 : vector<32x2xf32>
    %cst_4 = arith.constant dense<0.000000e+00> : vector<2xf32>
    %7 = vector.multi_reduction <add>, %6, %cst_4 [0] : vector<32x2xf32> to vector<2xf32>
    %8 = vector.shape_cast %7 : vector<2xf32> to vector<1x2xf32>
    %cst_5 = arith.constant 0.000000e+00 : f32
    %9 = vector.broadcast %cst_5 : f32 to vector<1x2xf32>
    %10 = arith.maximumf %8, %9 : vector<1x2xf32>
    %c0_6 = arith.constant 0 : index
    %c0_7 = arith.constant 0 : index
    %11 = vector.load %arg3[%c0_6, %c0_7] : memref<32x2xf32, #tpu.memory_space<vmem>>, vector<32x2xf32>
    %12 = vector.broadcast %10 : vector<1x2xf32> to vector<32x2xf32>
    %13 = arith.mulf %11, %12 : vector<32x2xf32>
    %cst_8 = arith.constant dense<0.000000e+00> : vector<32xf32>
    %14 = vector.multi_reduction <add>, %13, %cst_8 [1] : vector<32x2xf32> to vector<32xf32>
    %15 = vector.shape_cast %14 : vector<32xf32> to vector<32x1xf32>
    %16 = arith.negf %15 : vector<32x1xf32>
    %17 = math.exp %16 : vector<32x1xf32>
    %cst_9 = arith.constant 1.000000e+00 : f32
    %18 = vector.broadcast %cst_9 : f32 to vector<32x1xf32>
    %19 = arith.addf %18, %17 : vector<32x1xf32>
    %20 = arith.divf %18, %19 : vector<32x1xf32>
    %21 = vector.broadcast %20 : vector<32x1xf32> to vector<32x64xf32>
    %22 = arith.mulf %1, %21 : vector<32x64xf32>
    %c0_10 = arith.constant 0 : index
    %c0_11 = arith.constant 0 : index
    %c0_12 = arith.constant 0 : index
    %23 = vector.load %arg4[%c0_10, %c0_11, %c0_12] : memref<1x32x64xf32, #tpu.memory_space<vmem>>, vector<1x32x64xf32>
    %24 = vector.shape_cast %23 : vector<1x32x64xf32> to vector<32x64xf32>
    %25 = vector.shape_cast %22 : vector<32x64xf32> to vector<1x32x64xf32>
    tpu.vector_store %arg4[%c0_10, %c0_11, %c0_12], %25 {strides = array<i32>} : memref<1x32x64xf32, #tpu.memory_space<vmem>>, vector<1x32x64xf32>,
    return
  }
  func.func @transform_0(%arg0: i32) -> (i32, i32, i32) {
    %c0_i32 = arith.constant 0 : i32
    %c0_i32_0 = arith.constant 0 : i32
    %c0_i32_1 = arith.constant 0 : i32
    return %arg0, %c0_i32, %c0_i32_0 : i32, i32, i32
  }
  func.func @transform_1(%arg0: i32) -> (i32, i32) {
    %c0_i32 = arith.constant 0 : i32
    %c0_i32_0 = arith.constant 0 : i32
    %c0_i32_1 = arith.constant 0 : i32
    return %c0_i32, %c0_i32_0 : i32, i32
  }
  func.func @transform_2(%arg0: i32) -> (i32, i32) {
    %c0_i32 = arith.constant 0 : i32
    %c0_i32_0 = arith.constant 0 : i32
    %c0_i32_1 = arith.constant 0 : i32
    return %c0_i32, %c0_i32_0 : i32, i32
  }
  func.func @transform_3(%arg0: i32) -> (i32, i32, i32) {
    %c0_i32 = arith.constant 0 : i32
    %c0_i32_0 = arith.constant 0 : i32
    %c0_i32_1 = arith.constant 0 : i32
    return %arg0, %c0_i32, %c0_i32_0 : i32, i32, i32
  }
}

</mosaic_0001>

<llo_original>
// kernel: tpu_custom_call.1
$region0: #{tpu_custom_call.1}
  #allocation0 [shape = 'u32[]', space=smem, size = 0x4, offset = 0x4, fixed_abs, tag = 'smem constant byte address 0x4 - core index']
  #allocation1 [shape = 'u32[144,128]{1,0:T(1,128)}', space=vmem, size = 0x12000, scoped, tag = 'internal scratch']
  %s0 = inlined_call_operand.vmem [shape: f32[2,32,64], index: 0, kind: input, shape index: {}]
  %s1 = inlined_call_operand.vmem [shape: f32[32,2], index: 1, kind: input, shape index: {}]
  %s2 = inlined_call_operand.vmem [shape: f32[32,2], index: 2, kind: input, shape index: {}]
  %s3 = inlined_call_operand.hbm [shape: f32[2,32,64], index: 3, kind: output, shape index: {}]
  %s4 = sld [smem:[#allocation0]]
  $region45: #{tpu_custom_call.1} parent=0
    _
  %s6 = ssub.s32 1, %s4
  %s7 = scalar_select 0, %s6, %s4
  $region1: #{tpu_custom_call.1} parent=0
    #allocation2 [shape = 'u8[32768]{0}', space=vmem, size = 0x8000, scoped, tag = 'output window, operand 0']
    #allocation3 [shape = 's32[2]{0}', space=sflag, size = 0x8, scoped, tag = 'scoped memory for tpu_custom_call.1']
    %8 = vsyncpa [#allocation3], 0
    %s9 = scalar_lea.sflag [#allocation3], 1
    %10 = vsyncpa %s9, 0
    loop: start=0, step=1, limit=4
    $region2: #{tpu_custom_call.1} parent=1 // loop_pre_header
      _
    $region3: #{tpu_custom_call.1} parent=1 // loop_header
      %s12 = sphi 0, %s16
      %p13 = scmp.ge.s32.totalorder %s12, 4
      %s22 = sphi 0, %s24
      %s25 = sphi 0, %s22
      %s26 = sphi 0, %s25
      %s42 = sphi 0, %s26
      %s46 = sphi 0, %s46
      %s48 = sphi 0, %s46
      %s49 = sphi 0, %s48
      %s63 = sphi 0, %s49
      %s67 = sphi 0, %s67
      %s69 = sphi 0, %s67
      %s70 = sphi 0, %s69
      %s84 = sphi 0, %s70
      %s90 = sphi 0, %s92
      %s93 = sphi 0, %s90
      %s94 = sphi 0, %s93
      %s110 = sphi 0, %s94
    $region4: #{tpu_custom_call.1} parent=1 // loop_header_branch
      %15 = sbr.rel (%p13) target = $region8
    $region5: #{tpu_custom_call.1} parent=1 // loop_body
      %s17 = ssub.s32 %s12, 1
      %s18 = ssub.s32 %s12, 2
      %s19 = sadd.s32 %s12, 1
      %s20 = ssub.s32 %s12, %s19
      %p21 = scmp.eq.s32.totalorder %s20, 0
      %s23 = sadd.s32 %s22, 1
      %s24 = scalar_select %p21, %s22, %s23
      %p27 = pneg %p21
      %p28 = scmp.eq.s32.totalorder %s12, 1
      %p29 = por %p27, %p28
      %p30 = scmp.ne.s32.totalorder %s22, %s25
      %p31 = scmp.eq.s32.totalorder %s12, 0
      %p32 = por %p30, %p31
      %p33 = scmp.ne.s32.totalorder %s22, %s25
      %p34 = scmp.eq.s32.totalorder %s17, 1
      %p35 = por %p33, %p34
      %p36 = scmp.ne.s32.totalorder %s25, %s26
      %p37 = scmp.eq.s32.totalorder %s17, 0
      %p38 = por %p36, %p37
      %p39 = scmp.ne.s32.totalorder %s25, %s26
      %p40 = scmp.eq.s32.totalorder %s18, 1
      %p41 = por %p39, %p40
      %p43 = scmp.ne.s32.totalorder %s26, %s42
      %p44 = scmp.eq.s32.totalorder %s18, 0
      %p45 = por %p43, %p44
      %s47 = sadd.s32 %s46, 1
      %p50 = scmp.eq.s32.totalorder %s12, 1
      %p51 = scmp.ne.s32.totalorder %s46, %s48
      %p52 = scmp.eq.s32.totalorder %s12, 0
      %p53 = por %p51, %p52
      %p54 = scmp.ne.s32.totalorder %s46, %s48
      %p55 = scmp.eq.s32.totalorder %s17, 1
      %p56 = por %p54, %p55
      %p57 = scmp.ne.s32.totalorder %s48, %s49
      %p58 = scmp.eq.s32.totalorder %s17, 0
      %p59 = por %p57, %p58
      %p60 = scmp.ne.s32.totalorder %s48, %s49
      %p61 = scmp.eq.s32.totalorder %s18, 1
      %p62 = por %p60, %p61
      %p64 = scmp.ne.s32.totalorder %s49, %s63
      %p65 = scmp.eq.s32.totalorder %s18, 0
      %p66 = por %p64, %p65
      %s68 = sadd.s32 %s67, 1
      %p71 = scmp.eq.s32.totalorder %s12, 1
      %p72 = scmp.ne.s32.totalorder %s67, %s69
      %p73 = scmp.eq.s32.totalorder %s12, 0
      %p74 = por %p72, %p73
      %p75 = scmp.ne.s32.totalorder %s67, %s69
      %p76 = scmp.eq.s32.totalorder %s17, 1
      %p77 = por %p75, %p76
      %p78 = scmp.ne.s32.totalorder %s69, %s70
      %p79 = scmp.eq.s32.totalorder %s17, 0
      %p80 = por %p78, %p79
      %p81 = scmp.ne.s32.totalorder %s69, %s70
      %p82 = scmp.eq.s32.totalorder %s18, 1
      %p83 = por %p81, %p82
      %p85 = scmp.ne.s32.totalorder %s70, %s84
      %p86 = scmp.eq.s32.totalorder %s18, 0
      %p87 = por %p85, %p86
      %s88 = ssub.s32 %s12, %s19
      %p89 = scmp.eq.s32.totalorder %s88, 0
      %s91 = sadd.s32 %s90, 1
      %s92 = scalar_select %p89, %s90, %s91
      %p95 = pneg %p89
      %p96 = scmp.eq.s32.totalorder %s12, 1
      %p97 = por %p95, %p96
      %p98 = scmp.ne.s32.totalorder %s90, %s93
      %p99 = scmp.eq.s32.totalorder %s12, 0
      %p100 = por %p98, %p99
      %p101 = scmp.ne.s32.totalorder %s90, %s93
      %p102 = scmp.eq.s32.totalorder %s17, 1
      %p103 = por %p101, %p102
      %p104 = scmp.ne.s32.totalorder %s93, %s94
      %p105 = scmp.eq.s32.totalorder %s17, 0
      %p106 = por %p104, %p105
      %p107 = scmp.ne.s32.totalorder %s93, %s94
      %p108 = scmp.eq.s32.totalorder %s18, 1
      %p109 = por %p107, %p108
      %p111 = scmp.ne.s32.totalorder %s94, %s110
      %p112 = scmp.eq.s32.totalorder %s18, 0
      %p113 = por %p111, %p112
      %p114 = scmp.le.s32.totalorder 1, %s12
      %p115 = scmp.lt.s32.totalorder %s12, 3
      %p116 = pnand %p114, %p115
      %p117 = pneg %p116
      // Predicated region
      $region9: #{tpu_custom_call.1} parent=5 // pred_check
        _
      $region10: #{tpu_custom_call.1} parent=5 // pred_check_branch
        %119 = sbr.rel (%p116) target = $region12
      $region11: #{tpu_custom_call.1} parent=5 // pred_region
        %s120 = ssub.s32 %s12, 1
        // Predicated region
        $region13: #{tpu_custom_call.1} parent=11 // pred_check
          %p121 = pneg %p59
        $region14: #{tpu_custom_call.1} parent=11 // pred_check_branch
          %123 = sbr.rel (%p121) target = $region16
        $region15: #{tpu_custom_call.1} parent=11 // pred_region
          _
        $region16: #{tpu_custom_call.1} parent=11 // pred_fallthru
          _
        // Predicated region
        $region17: #{tpu_custom_call.1} parent=11 // pred_check
          %p124 = pneg %p80
        $region18: #{tpu_custom_call.1} parent=11 // pred_check_branch
          %126 = sbr.rel (%p124) target = $region20
        $region19: #{tpu_custom_call.1} parent=11 // pred_region
          _
        $region20: #{tpu_custom_call.1} parent=11 // pred_fallthru
          _
      $region12: #{tpu_custom_call.1} parent=5 // pred_fallthru
        _
      %p127 = scmp.lt.s32.totalorder %s12, 2
      // Predicated region
      $region21: #{tpu_custom_call.1} parent=5 // pred_check
        %p128 = pneg %p127
      $region22: #{tpu_custom_call.1} parent=5 // pred_check_branch
        %130 = sbr.rel (%p128) target = $region24
      $region23: #{tpu_custom_call.1} parent=5 // pred_region
        // Predicated region
        $region25: #{tpu_custom_call.1} parent=23 // pred_check
          %p131 = pneg %p32
        $region26: #{tpu_custom_call.1} parent=23 // pred_check_branch
          %133 = sbr.rel (%p131) target = $region28
        $region27: #{tpu_custom_call.1} parent=23 // pred_region
          %p134 = scmp.lt.s32.totalorder %s12, 1
          %s135 = scalar_select %p134, %s12, 1
          %s136 = smul.addr %s135, 4
          %s137 = smul.addr %s136, 8
          %s138 = scalar_lea.vmem %s0, %s137
        $region28: #{tpu_custom_call.1} parent=23 // pred_fallthru
          _
      $region24: #{tpu_custom_call.1} parent=5 // pred_fallthru
        _
      %p139 = scmp.le.s32.totalorder 1, %s12
      %p140 = scmp.lt.s32.totalorder %s12, 3
      %p141 = pnand %p139, %p140
      %p142 = pneg %p141
      // Predicated region
      $region29: #{tpu_custom_call.1} parent=5 // pred_check
        _
      $region30: #{tpu_custom_call.1} parent=5 // pred_check_branch
        %144 = sbr.rel (%p141) target = $region32
      $region31: #{tpu_custom_call.1} parent=5 // pred_region
        %s145 = ssub.s32 %s12, 1
        %p146 = scmp.lt.s32.totalorder %s17, 1
        %s147 = scalar_select %p146, %s17, 1
        %s148 = smul.addr %s147, 4
        %s149 = smul.addr %s148, 8
        %s150 = scalar_lea.vmem %s0, %s149
        %p151 = pneg %p38
        %p152 = pneg %p35
        %p153 = pneg %p59
        %p154 = pneg %p56
        %p155 = pneg %p80
        %p156 = pneg %p77
        %p157 = pneg %p106
        %p158 = pneg %p103
        %s159 = sand.u32 %s93, 1
        %s160 = scalar_lea.sflag [#allocation3], %s159
        %s161 = sand.u32 %s93, 1
        %s162 = smul.addr %s161, 32
        %s163 = scalar_lea.vmem [#allocation2], %s162
        %p164 = scmp.lt.s32.totalorder %s17, 1
        %s165 = scalar_select %p164, %s17, 1
        %s166 = smul.addr %s165, 4
        %s167 = smul.addr %s166, 8
        %s168 = scalar_lea.vmem %s0, %s167
        %v169 = vld [vmem:[%s168] sm:$0xff]
        %v170 = vld [vmem:[%s168 + $0x8] sm:$0xff]
        %v171 = vld [vmem:[%s168 + $0x10] sm:$0xff]
        %v172 = vld [vmem:[%s168 + $0x18] sm:$0xff]
        %vm173 = vcmask 523264
        %v174 = vsel %vm173, %v169, 0.0
        %175 = vadd.xlane.f32.xlu0 %v174
        %v176 = vpop.xlane.xlu0 %175
        %v177 = vsel %vm173, %v170, 0.0
        %178 = vadd.xlane.f32.xlu0 %v177
        %v179 = vpop.xlane.xlu0 %178
        %v180 = vsel %vm173, %v171, 0.0
        %181 = vadd.xlane.f32.xlu0 %v180
        %v182 = vpop.xlane.xlu0 %181
        %v183 = vsel %vm173, %v172, 0.0
        %184 = vadd.xlane.f32.xlu0 %v183
        %v185 = vpop.xlane.xlu0 %184
        %v186 = vld [vmem:[%s1] sm:$0xff]
        %v187 = vld [vmem:[%s1 + $0x8] sm:$0xff]
        %v188 = vld [vmem:[%s1 + $0x10] sm:$0xff]
        %v189 = vld [vmem:[%s1 + $0x18] sm:$0xff]
        %v190 = vmul.f32 %v186, %v176
        %v191 = vmul.f32 %v187, %v179
        %v192 = vmul.f32 %v188, %v182
        %v193 = vmul.f32 %v189, %v185
        %vm194 = vcmask 15360
        %v195 = vsel %vm194, %v190, 0.0
        %v196 = vsel %vm194, %v191, 0.0
        %v197 = vadd.f32 %v195, %v196
        %v198 = vsel %vm194, %v192, 0.0
        %v199 = vadd.f32 %v197, %v198
        %v200 = vsel %vm194, %v193, 0.0
        %v201 = vadd.f32 %v199, %v200
        %v202 = vrot.slane %v201, 4
        %v203 = vadd.f32 %v201, %v202
        %v204 = vrot.slane %v203, 2
        %v205 = vadd.f32 %v203, %v204
        %v206 = vrot.slane %v205, 1
        %v207 = vadd.f32 %v205, %v206
        %v208 = vmax.f32 %v207, 0.0
        %v209 = vld [vmem:[%s2] sm:$0xff]
        %v210 = vld [vmem:[%s2 + $0x8] sm:$0xff]
        %v211 = vld [vmem:[%s2 + $0x10] sm:$0xff]
        %v212 = vld [vmem:[%s2 + $0x18] sm:$0xff]
        %v213 = vmul.f32 %v209, %v208
        %v214 = vmul.f32 %v210, %v208
        %v215 = vmul.f32 %v211, %v208
        %v216 = vmul.f32 %v212, %v208
        %v217 = vsel %vm194, %v213, 0.0
        %218 = vadd.xlane.f32.xlu0 %v217
        %v219 = vpop.xlane.xlu0 %218
        %v220 = vsel %vm194, %v214, 0.0
        %221 = vadd.xlane.f32.xlu0 %v220
        %v222 = vpop.xlane.xlu0 %221
        %v223 = vsel %vm194, %v215, 0.0
        %224 = vadd.xlane.f32.xlu0 %v223
        %v225 = vpop.xlane.xlu0 %224
        %v226 = vsel %vm194, %v216, 0.0
        %227 = vadd.xlane.f32.xlu0 %v226
        %v228 = vpop.xlane.xlu0 %227
        %v229 = vxor.u32 %v219, 2147483648
        %v230 = vxor.u32 %v222, 2147483648
        %v231 = vxor.u32 %v225, 2147483648
        %v232 = vxor.u32 %v228, 2147483648
        %v233 = vmul.f32 %v229, 1.442695
        %v234 = vpow.pop %v233
        %v235 = vmul.f32 %v230, 1.442695
        %v236 = vpow.pop %v235
        %v237 = vmul.f32 %v231, 1.442695
        %v238 = vpow.pop %v237
        %v239 = vmul.f32 %v232, 1.442695
        %v240 = vpow.pop %v239
        %v241 = vadd.f32 %v234, 1.0
        %v242 = vadd.f32 %v236, 1.0
        %v243 = vadd.f32 %v238, 1.0
        %v244 = vadd.f32 %v240, 1.0
        %v245 = vrcp.pop %v241
        %v246 = vmul.f32 1.0, %v245
        %v247 = vrcp.pop %v242
        %v248 = vmul.f32 1.0, %v247
        %v249 = vrcp.pop %v243
        %v250 = vmul.f32 1.0, %v249
        %v251 = vrcp.pop %v244
        %v252 = vmul.f32 1.0, %v251
        %v253 = vmul.f32 %v169, %v246
        %v254 = vmul.f32 %v170, %v248
        %v255 = vmul.f32 %v171, %v250
        %v256 = vmul.f32 %v172, %v252
        %257 = vst.msk [vmem:[%s163] sm:$0xff] %vm173, %v253
        %258 = vst.msk [vmem:[%s163 + $0x8] sm:$0xff] %vm173, %v254
        %259 = vst.msk [vmem:[%s163 + $0x10] sm:$0xff] %vm173, %v255
        %260 = vst.msk [vmem:[%s163 + $0x18] sm:$0xff] %vm173, %v256
        %s261 = sand.u32 %s93, 1
        %s262 = scalar_lea.sflag [#allocation3], %s261
        %s263 = sand.u32 %s93, 1
        %s264 = smul.addr %s263, 32
        %s265 = scalar_lea.vmem [#allocation2], %s264
        // Predicated region
        $region33: #{tpu_custom_call.1} parent=31 // pred_check
          %p266 = pneg %p103
        $region34: #{tpu_custom_call.1} parent=31 // pred_check_branch
          %268 = sbr.rel (%p266) target = $region36
        $region35: #{tpu_custom_call.1} parent=31 // pred_region
          %s270 = ssub.s32 512, 512
          %271 = vsyncadd %s262, %s270
          %s272 = smul.addr %s17, 4
          %s273 = smul.addr %s272, 128
          %s274 = scalar_lea.hbm %s3, %s273
          %s275 = sshll.u32 %s265, 4
          %s276 = int_to_ptr.vmem [resolvable:$true] %s275
          %281 = dma.vmem_to_hbm [thread:$0]  %s276, 512, %s274, %s262, 128, 128, 8
        $region36: #{tpu_custom_call.1} parent=31 // pred_fallthru
          _
      $region32: #{tpu_custom_call.1} parent=5 // pred_fallthru
        _
      %p282 = scmp.le.s32.totalorder 2, %s12
      // Predicated region
      $region37: #{tpu_custom_call.1} parent=5 // pred_check
        %p283 = pneg %p282
      $region38: #{tpu_custom_call.1} parent=5 // pred_check_branch
        %285 = sbr.rel (%p283) target = $region40
      $region39: #{tpu_custom_call.1} parent=5 // pred_region
        %s286 = ssub.s32 %s12, 2
        // Predicated region
        $region41: #{tpu_custom_call.1} parent=39 // pred_check
          %p287 = pneg %p109
        $region42: #{tpu_custom_call.1} parent=39 // pred_check_branch
          %289 = sbr.rel (%p287) target = $region44
        $region43: #{tpu_custom_call.1} parent=39 // pred_region
          %s290 = sand.u32 %s94, 1
          %s291 = scalar_lea.sflag [#allocation3], %s290
          %s292 = sand.u32 %s94, 1
          %s293 = smul.addr %s292, 32
          %s294 = scalar_lea.vmem [#allocation2], %s293
          %295 = dma.done %s291, 512
        $region44: #{tpu_custom_call.1} parent=39 // pred_fallthru
          _
      $region40: #{tpu_custom_call.1} parent=5 // pred_fallthru
        _
    $region6: #{tpu_custom_call.1} parent=1 // loop_footer
      %s16 = sadd.s32 1, %s12
    $region7: #{tpu_custom_call.1} parent=1 // loop_footer_branch
      %11 = sbr.rel target = $region3
    $region8: #{tpu_custom_call.1} parent=1 // loop_exit
      _
    %296 = vsyncpa [#allocation3], 1
    %s297 = scalar_lea.sflag [#allocation3], 1
    %298 = vsyncpa %s297, 1

</llo_original>
